<compile_context>
chip_gen: v7x
topology: tpu7x:2x2x1
jax: 0.10.0
libtpu: 0.0.40
codegen_flags: <defaults>
</compile_context>

<pallas_src>
import jax
import jax.numpy as jnp
from jax.experimental import pallas as pl
from jax.experimental.pallas import tpu as pltpu


def neural_plda_kernel(x1_ref, x2_ref, w1t_ref, b1_ref, w2t_ref, b2_ref,
                       p_ref, q_ref, s_ref):
    tm = x1_ref.shape[0]
    mxu_dtype = w1t_ref.dtype                    # bf16 (default) or f32

    w1t = w1t_ref[...]                           # (D, L)  resident
    w2t = w2t_ref[...]                           # (L, K)  resident
    b1 = b1_ref[...]                             # (1, L)  f32
    b2 = b2_ref[...]                             # (1, K)  f32
    P = p_ref[...]                               # (1, K)  already P_sqrt**2
    Q = q_ref[...]                               # (1, K)

    def head(x_ref):
        # centering_and_LDA: MXU in bf16 (or f32), f32 accumulation.
        x = x_ref[...].astype(mxu_dtype)
        y = jnp.dot(x, w1t, preferred_element_type=jnp.float32) + b1
        # F.normalize: y / max(||y||, 1e-12) == y * rsqrt(max(||y||^2, 1e-24))
        ss = jnp.sum(y * y, axis=-1, keepdims=True)
        y = y * jax.lax.rsqrt(jnp.maximum(ss, 1e-24))
        # centering_and_wccn_plda
        return jnp.dot(y.astype(mxu_dtype), w2t,
                       preferred_element_type=jnp.float32) + b2

    z1 = head(x1_ref)                            # (tm, K) f32
    z2 = head(x2_ref)

    # PLDA scoring: single fused cross-lane reduction.
    t = (z1 * z1) * Q + (z2 * z2) * Q + 2.0 * (z1 * z2) * P
    s = jnp.sum(t, axis=-1, keepdims=True)       # (tm, 1)
    s_ref[...] = s.reshape(1, tm)                # lane-dense (1, tm) store


def _round_up(a, m):
    return ((a + m - 1) // m) * m


def _cdiv(a, b):
    return (a + b - 1) // b


def neural_plda_forward(x1, x2, w1, b1, w2, b2, p_sqrt, q, *,
                        max_tile=1024, use_bf16=True, min_grid_steps=2):
    """x1, x2: (B, D). w1: (L, D), b1: (L,), w2: (K, L), b2: (K,). Returns (B,) f32."""
    B, D = x1.shape
    L = w1.shape[0]
    K = w2.shape[0]

    # ---- batch tile: multiple of 128 (lane-dense score stores), <= max_tile.
    #      For v7x megacore, keep >= min_grid_steps parallel grid steps when
    #      the batch spans more than one 128-row chunk. ----
    tm = min(_round_up(B, 128), _round_up(max_tile, 128))
    if B > 128 and _cdiv(B, tm) < min_grid_steps:
        tm = max(_round_up(_cdiv(B, min_grid_steps), 128), 128)
    G = _cdiv(B, tm)
    # No jnp.pad / jnp.stack: the last input block may overhang the batch; the
    # out-of-bounds rows produce garbage scores that are sliced off below.

    mxu_dtype = jnp.bfloat16 if use_bf16 else jnp.float32

    # Glue: pre-transpose + cast weights (tiny), reshape 1-D params to rows,
    # hoist the grid-invariant P = P_sqrt**2. Scoring params stay f32.
    w1t = jnp.asarray(w1, jnp.float32).T.astype(mxu_dtype)     # (D, L)
    w2t = jnp.asarray(w2, jnp.float32).T.astype(mxu_dtype)     # (L, K)
    b1r = jnp.asarray(b1, jnp.float32).reshape(1, L)
    b2r = jnp.asarray(b2, jnp.float32).reshape(1, K)
    p_sq = jnp.asarray(p_sqrt, jnp.float32)
    pr = (p_sq * p_sq).reshape(1, K)
    qr = jnp.asarray(q, jnp.float32).reshape(1, K)

    out = pl.pallas_call(
        neural_plda_kernel,
        out_shape=jax.ShapeDtypeStruct((G, tm), jnp.float32),
        grid_spec=pltpu.PrefetchScalarGridSpec(
            num_scalar_prefetch=0,
            grid=(G,),
            in_specs=[
                pl.BlockSpec((tm, D), lambda i: (i, 0)),   # x1 tile (streamed)
                pl.BlockSpec((tm, D), lambda i: (i, 0)),   # x2 tile (streamed)
                pl.BlockSpec((D, L), lambda i: (0, 0)),    # W1^T (resident)
                pl.BlockSpec((1, L), lambda i: (0, 0)),    # b1
                pl.BlockSpec((L, K), lambda i: (0, 0)),    # W2^T (resident)
                pl.BlockSpec((1, K), lambda i: (0, 0)),    # b2
                pl.BlockSpec((1, K), lambda i: (0, 0)),    # P (= P_sqrt^2)
                pl.BlockSpec((1, K), lambda i: (0, 0)),    # Q
            ],
            out_specs=pl.BlockSpec((1, tm), lambda i: (i, 0)),  # lane-dense
        ),
        compiler_params=pltpu.CompilerParams(
            dimension_semantics=("parallel",)),   # megacore-shardable batch axis
    )(x1, x2, w1t, b1r, w2t, b2r, pr, qr)
    return out.reshape(G * tm)[:B]                # (B,) like the PyTorch module


def neural_plda_ref(x1, x2, w1, b1, w2, b2, p_sqrt, q, *, mxu_dtype=jnp.float32):
    """Pure-JAX reference mirroring the PyTorch forward (optionally bf16 MXU)."""
    w1t = w1.T.astype(mxu_dtype)
    w2t = w2.T.astype(mxu_dtype)

    def head(x):
        y = jnp.dot(x.astype(mxu_dtype), w1t,
                    preferred_element_type=jnp.float32) + b1
        n = jnp.sqrt(jnp.sum(y * y, axis=1, keepdims=True))
        y = y / jnp.maximum(n, 1e-12)
        return jnp.dot(y.astype(mxu_dtype), w2t,
                       preferred_element_type=jnp.float32) + b2

    z1 = head(x1)
    z2 = head(x2)
    P = p_sqrt * p_sqrt
    return (jnp.sum(z1 * q * z1, axis=1)
            + jnp.sum(z2 * q * z2, axis=1)
            + 2.0 * jnp.sum(z1 * P * z2, axis=1))


if __name__ == "__main__":
    # Shapes consistent with the module:
    #   xvector_dim=128, layer1_LDA_dim=64, layer2_PLDA_spkfactor_dim=32
    B, D, L, K = 16, 128, 64, 32

    key = jax.random.PRNGKey(0)
    ks = jax.random.split(key, 8)
    x1 = jax.random.normal(ks[0], (B, D), dtype=jnp.float32)
    x2 = jax.random.normal(ks[1], (B, D), dtype=jnp.float32)

    # Deterministic synthetic parameters (shapes from __init__).
    w1 = jax.random.uniform(ks[2], (L, D), jnp.float32, -0.1, 0.1)
    b1 = jax.random.uniform(ks[3], (L,), jnp.float32, -0.1, 0.1)
    w2 = jax.random.uniform(ks[4], (K, L), jnp.float32, -0.1, 0.1)
    b2 = jax.random.uniform(ks[5], (K,), jnp.float32, -0.1, 0.1)
    p_sqrt = jax.random.uniform(ks[6], (K,), jnp.float32)   # torch.rand
    q = jax.random.uniform(ks[7], (K,), jnp.float32)        # torch.rand
    # TODO(synk): Th{beta}/threshold_Xent/alpha/dropout and the loss/minc
    # methods are not part of forward and are not implemented here.

    # --- exact f32 path: single grid step, ragged tile (B=16 < tm=128). ---
    s = jax.block_until_ready(
        neural_plda_forward(x1, x2, w1, b1, w2, b2, p_sqrt, q, use_bf16=False))
    s_ref = neural_plda_ref(x1, x2, w1, b1, w2, b2, p_sqrt, q)
    assert s.shape == (B,)
    assert jnp.allclose(s, s_ref, atol=1e-3, rtol=1e-3), (s, s_ref)

    # --- default bf16-MXU path: multi-step parallel grid + ragged last block
    #     (B=200 -> tm=128, G=2, last block overhangs by 56 rows). ---
    B2 = 200
    x1b = jax.random.normal(ks[0], (B2, D), dtype=jnp.float32)
    x2b = jax.random.normal(ks[1], (B2, D), dtype=jnp.float32)
    s2 = jax.block_until_ready(
        neural_plda_forward(x1b, x2b, w1, b1, w2, b2, p_sqrt, q))
    s2_bf16 = neural_plda_ref(x1b, x2b, w1, b1, w2, b2, p_sqrt, q,
                              mxu_dtype=jnp.bfloat16)
    s2_f32 = neural_plda_ref(x1b, x2b, w1, b1, w2, b2, p_sqrt, q)
    assert s2.shape == (B2,)
    # Tight check against a bf16-consistent reference, loose sanity check
    # against the exact f32 reference (bf16 MXU rounding).
    assert jnp.allclose(s2, s2_bf16, atol=2e-3, rtol=2e-3), (s2, s2_bf16)
    assert jnp.allclose(s2, s2_f32, atol=5e-2, rtol=5e-2), (s2, s2_f32)

    print("KERNEL_OK")
</pallas_src>

<mosaic_0001>
module attributes {stable_mosaic.version = 11 : i64} {
  func.func @neural_plda_kernel(%arg0: i32, %arg1: memref<128x128xf32, #tpu.memory_space<vmem>>, %arg2: memref<128x128xf32, #tpu.memory_space<vmem>>, %arg3: memref<128x64xf32, #tpu.memory_space<vmem>>, %arg4: memref<1x64xf32, #tpu.memory_space<vmem>>, %arg5: memref<64x32xf32, #tpu.memory_space<vmem>>, %arg6: memref<1x32xf32, #tpu.memory_space<vmem>>, %arg7: memref<1x32xf32, #tpu.memory_space<vmem>>, %arg8: memref<1x32xf32, #tpu.memory_space<vmem>>, %arg9: memref<1x128xf32, #tpu.memory_space<vmem>>) attributes {dimension_semantics = [#tpu.dimension_semantics<parallel>], iteration_bounds = array<i64: 1>, scalar_prefetch = 0 : i64, scratch_operands = 0 : i64, tpu.core_type = #tpu.core_type<tc>, window_params = [{transform_indices = @transform_0, window_bounds = array<i64: 128, 128>}, {transform_indices = @transform_1, window_bounds = array<i64: 128, 128>}, {pipeline_mode = #tpu.pipeline_mode<synchronous>, transform_indices = @transform_2, window_bounds = array<i64: 128, 64>}, {pipeline_mode = #tpu.pipeline_mode<synchronous>, transform_indices = @transform_3, window_bounds = array<i64: 1, 64>}, {pipeline_mode = #tpu.pipeline_mode<synchronous>, transform_indices = @transform_4, window_bounds = array<i64: 64, 32>}, {pipeline_mode = #tpu.pipeline_mode<synchronous>, transform_indices = @transform_5, window_bounds = array<i64: 1, 32>}, {pipeline_mode = #tpu.pipeline_mode<synchronous>, transform_indices = @transform_6, window_bounds = array<i64: 1, 32>}, {pipeline_mode = #tpu.pipeline_mode<synchronous>, transform_indices = @transform_7, window_bounds = array<i64: 1, 32>}, {transform_indices = @transform_8, window_bounds = array<i64: 1, 128>}]} {
    %c0 = arith.constant 0 : index
    %c0_0 = arith.constant 0 : index
    %0 = vector.load %arg3[%c0, %c0_0] : memref<128x64xf32, #tpu.memory_space<vmem>>, vector<128x64xf32>
    %c0_1 = arith.constant 0 : index
    %c0_2 = arith.constant 0 : index
    %1 = vector.load %arg5[%c0_1, %c0_2] : memref<64x32xf32, #tpu.memory_space<vmem>>, vector<64x32xf32>
    %c0_3 = arith.constant 0 : index
    %c0_4 = arith.constant 0 : index
    %2 = vector.load %arg4[%c0_3, %c0_4] : memref<1x64xf32, #tpu.memory_space<vmem>>, vector<1x64xf32>
    %c0_5 = arith.constant 0 : index
    %c0_6 = arith.constant 0 : index
    %3 = vector.load %arg6[%c0_5, %c0_6] : memref<1x32xf32, #tpu.memory_space<vmem>>, vector<1x32xf32>
    %c0_7 = arith.constant 0 : index
    %c0_8 = arith.constant 0 : index
    %4 = vector.load %arg7[%c0_7, %c0_8] : memref<1x32xf32, #tpu.memory_space<vmem>>, vector<1x32xf32>
    %c0_9 = arith.constant 0 : index
    %c0_10 = arith.constant 0 : index
    %5 = vector.load %arg8[%c0_9, %c0_10] : memref<1x32xf32, #tpu.memory_space<vmem>>, vector<1x32xf32>
    %c0_11 = arith.constant 0 : index
    %c0_12 = arith.constant 0 : index
    %6 = vector.load %arg1[%c0_11, %c0_12] : memref<128x128xf32, #tpu.memory_space<vmem>>, vector<128x128xf32>
    %cst = arith.constant dense<0.000000e+00> : vector<128x64xf32>
    %7 = tpu.matmul %6, %0, %cst {dimension_numbers = #tpu.dot_dimension_numbers<[1], [0], [0], [1], [0, 0, 1, 1], [], []>} : vector<128x128xf32>, vector<128x64xf32>, vector<128x64xf32> -> vector<128x64xf32>
    %8 = vector.broadcast %2 : vector<1x64xf32> to vector<128x64xf32>
    %9 = arith.addf %7, %8 : vector<128x64xf32>
    %10 = arith.mulf %9, %9 : vector<128x64xf32>
    %cst_13 = arith.constant dense<0.000000e+00> : vector<128xf32>
    %11 = vector.multi_reduction <add>, %10, %cst_13 [1] : vector<128x64xf32> to vector<128xf32>
    %12 = vector.shape_cast %11 : vector<128xf32> to vector<128x1xf32>
    %cst_14 = arith.constant 1.000000e-24 : f32
    %13 = vector.broadcast %cst_14 : f32 to vector<128x1xf32>
    %14 = arith.maximumf %12, %13 : vector<128x1xf32>
    %15 = math.rsqrt %14 : vector<128x1xf32>
    %16 = vector.broadcast %15 : vector<128x1xf32> to vector<128x64xf32>
    %17 = arith.mulf %9, %16 : vector<128x64xf32>
    %cst_15 = arith.constant dense<0.000000e+00> : vector<128x32xf32>
    %18 = tpu.matmul %17, %1, %cst_15 {dimension_numbers = #tpu.dot_dimension_numbers<[1], [0], [0], [1], [0, 0, 1, 1], [], []>} : vector<128x64xf32>, vector<64x32xf32>, vector<128x32xf32> -> vector<128x32xf32>
    %19 = vector.broadcast %3 : vector<1x32xf32> to vector<128x32xf32>
    %20 = arith.addf %18, %19 : vector<128x32xf32>
    %c0_16 = arith.constant 0 : index
    %c0_17 = arith.constant 0 : index
    %21 = vector.load %arg2[%c0_16, %c0_17] : memref<128x128xf32, #tpu.memory_space<vmem>>, vector<128x128xf32>
    %cst_18 = arith.constant dense<0.000000e+00> : vector<128x64xf32>
    %22 = tpu.matmul %21, %0, %cst_18 {dimension_numbers = #tpu.dot_dimension_numbers<[1], [0], [0], [1], [0, 0, 1, 1], [], []>} : vector<128x128xf32>, vector<128x64xf32>, vector<128x64xf32> -> vector<128x64xf32>
    %23 = vector.broadcast %2 : vector<1x64xf32> to vector<128x64xf32>
    %24 = arith.addf %22, %23 : vector<128x64xf32>
    %25 = arith.mulf %24, %24 : vector<128x64xf32>
    %cst_19 = arith.constant dense<0.000000e+00> : vector<128xf32>
    %26 = vector.multi_reduction <add>, %25, %cst_19 [1] : vector<128x64xf32> to vector<128xf32>
    %27 = vector.shape_cast %26 : vector<128xf32> to vector<128x1xf32>
    %cst_20 = arith.constant 1.000000e-24 : f32
    %28 = vector.broadcast %cst_20 : f32 to vector<128x1xf32>
    %29 = arith.maximumf %27, %28 : vector<128x1xf32>
    %30 = math.rsqrt %29 : vector<128x1xf32>
    %31 = vector.broadcast %30 : vector<128x1xf32> to vector<128x64xf32>
    %32 = arith.mulf %24, %31 : vector<128x64xf32>
    %cst_21 = arith.constant dense<0.000000e+00> : vector<128x32xf32>
    %33 = tpu.matmul %32, %1, %cst_21 {dimension_numbers = #tpu.dot_dimension_numbers<[1], [0], [0], [1], [0, 0, 1, 1], [], []>} : vector<128x64xf32>, vector<64x32xf32>, vector<128x32xf32> -> vector<128x32xf32>
    %34 = vector.broadcast %3 : vector<1x32xf32> to vector<128x32xf32>
    %35 = arith.addf %33, %34 : vector<128x32xf32>
    %36 = arith.mulf %20, %20 : vector<128x32xf32>
    %37 = vector.broadcast %5 : vector<1x32xf32> to vector<128x32xf32>
    %38 = arith.mulf %36, %37 : vector<128x32xf32>
    %39 = arith.mulf %35, %35 : vector<128x32xf32>
    %40 = vector.broadcast %5 : vector<1x32xf32> to vector<128x32xf32>
    %41 = arith.mulf %39, %40 : vector<128x32xf32>
    %42 = arith.addf %38, %41 : vector<128x32xf32>
    %43 = arith.mulf %20, %35 : vector<128x32xf32>
    %cst_22 = arith.constant 2.000000e+00 : f32
    %44 = vector.broadcast %cst_22 : f32 to vector<128x32xf32>
    %45 = arith.mulf %44, %43 : vector<128x32xf32>
    %46 = vector.broadcast %4 : vector<1x32xf32> to vector<128x32xf32>
    %47 = arith.mulf %45, %46 : vector<128x32xf32>
    %48 = arith.addf %42, %47 : vector<128x32xf32>
    %cst_23 = arith.constant dense<0.000000e+00> : vector<128xf32>
    %49 = vector.multi_reduction <add>, %48, %cst_23 [1] : vector<128x32xf32> to vector<128xf32>
    %50 = vector.shape_cast %49 : vector<128xf32> to vector<128x1xf32>
    %51 = vector.shape_cast %50 : vector<128x1xf32> to vector<1x128xf32>
    %c0_24 = arith.constant 0 : index
    %c0_25 = arith.constant 0 : index
    %52 = vector.load %arg9[%c0_24, %c0_25] : memref<1x128xf32, #tpu.memory_space<vmem>>, vector<1x128xf32>
    tpu.vector_store %arg9[%c0_24, %c0_25], %51 {strides = array<i32>} : memref<1x128xf32, #tpu.memory_space<vmem>>, vector<1x128xf32>,
    return
  }
  func.func @transform_0(%arg0: i32) -> (i32, i32) {
    %c0_i32 = arith.constant 0 : i32
    %c0_i32_0 = arith.constant 0 : i32
    return %arg0, %c0_i32 : i32, i32
  }
  func.func @transform_1(%arg0: i32) -> (i32, i32) {
    %c0_i32 = arith.constant 0 : i32
    %c0_i32_0 = arith.constant 0 : i32
    return %arg0, %c0_i32 : i32, i32
  }
  func.func @transform_2(%arg0: i32) -> (i32, i32) {
    %c0_i32 = arith.constant 0 : i32
    %c0_i32_0 = arith.constant 0 : i32
    %c0_i32_1 = arith.constant 0 : i32
    return %c0_i32, %c0_i32_0 : i32, i32
  }
  func.func @transform_3(%arg0: i32) -> (i32, i32) {
    %c0_i32 = arith.constant 0 : i32
    %c0_i32_0 = arith.constant 0 : i32
    %c0_i32_1 = arith.constant 0 : i32
    return %c0_i32, %c0_i32_0 : i32, i32
  }
  func.func @transform_4(%arg0: i32) -> (i32, i32) {
    %c0_i32 = arith.constant 0 : i32
    %c0_i32_0 = arith.constant 0 : i32
    %c0_i32_1 = arith.constant 0 : i32
    return %c0_i32, %c0_i32_0 : i32, i32
  }
  func.func @transform_5(%arg0: i32) -> (i32, i32) {
    %c0_i32 = arith.constant 0 : i32
    %c0_i32_0 = arith.constant 0 : i32
    %c0_i32_1 = arith.constant 0 : i32
    return %c0_i32, %c0_i32_0 : i32, i32
  }
  func.func @transform_6(%arg0: i32) -> (i32, i32) {
    %c0_i32 = arith.constant 0 : i32
    %c0_i32_0 = arith.constant 0 : i32
    %c0_i32_1 = arith.constant 0 : i32
    return %c0_i32, %c0_i32_0 : i32, i32
  }
  func.func @transform_7(%arg0: i32) -> (i32, i32) {
    %c0_i32 = arith.constant 0 : i32
    %c0_i32_0 = arith.constant 0 : i32
    %c0_i32_1 = arith.constant 0 : i32
    return %c0_i32, %c0_i32_0 : i32, i32
  }
  func.func @transform_8(%arg0: i32) -> (i32, i32) {
    %c0_i32 = arith.constant 0 : i32
    %c0_i32_0 = arith.constant 0 : i32
    return %arg0, %c0_i32 : i32, i32
  }
}

</mosaic_0001>

<llo_original>
// kernel: tpu_custom_call.1
$region0: #{tpu_custom_call.1}
  #allocation0 [shape = 'u32[]', space=smem, size = 0x4, offset = 0x4, fixed_abs, tag = 'smem constant byte address 0x4 - core index']
  #allocation1 [shape = 'u32[144,128]{1,0:T(1,128)}', space=vmem, size = 0x12000, scoped, tag = 'internal scratch']
  %s0 = inlined_call_operand.vmem [shape: f32[16,128], index: 0, kind: input, shape index: {}]
  %s1 = inlined_call_operand.vmem [shape: f32[16,128], index: 1, kind: input, shape index: {}]
  %s2 = inlined_call_operand.vmem [shape: f32[128,64], index: 2, kind: input, shape index: {}]
  %s3 = inlined_call_operand.vmem [shape: f32[1,64], index: 3, kind: input, shape index: {}]
  %s4 = inlined_call_operand.vmem [shape: f32[64,32], index: 4, kind: input, shape index: {}]
  %s5 = inlined_call_operand.vmem [shape: f32[1,32], index: 5, kind: input, shape index: {}]
  %s6 = inlined_call_operand.vmem [shape: f32[1,32], index: 6, kind: input, shape index: {}]
  %s7 = inlined_call_operand.vmem [shape: f32[1,32], index: 7, kind: input, shape index: {}]
  %s8 = inlined_call_operand.hbm [shape: f32[1,128], index: 8, kind: output, shape index: {}]
  %s9 = sld [smem:[#allocation0]]
  $region42: #{tpu_custom_call.1} parent=0
    _
  %s11 = ssub.s32 1, %s9
  %s12 = scalar_select 0, %s11, %s9
  $region1: #{tpu_custom_call.1} parent=0
    #allocation2 [shape = 'u8[512]{0}', space=vmem, size = 0x400, scoped, tag = 'output window, operand 0, single buffered']
    #allocation3 [shape = 's32[1]{0}', space=sflag, size = 0x4, scoped, tag = 'scoped memory for tpu_custom_call.1']
    %13 = vsyncpa [#allocation3], 0
    // Predicated region
    $region2: #{tpu_custom_call.1} parent=1 // pred_check
      _
    $region3: #{tpu_custom_call.1} parent=1 // pred_check_branch
      %15 = sbr.rel (0) target = $region5
    $region4: #{tpu_custom_call.1} parent=1 // pred_region
      _
    $region5: #{tpu_custom_call.1} parent=1 // pred_fallthru
      _
    // Predicated region
    $region6: #{tpu_custom_call.1} parent=1 // pred_check
      _
    $region7: #{tpu_custom_call.1} parent=1 // pred_check_branch
      %17 = sbr.rel (0) target = $region9
    $region8: #{tpu_custom_call.1} parent=1 // pred_region
      _
    $region9: #{tpu_custom_call.1} parent=1 // pred_fallthru
      _
    // Predicated region
    $region10: #{tpu_custom_call.1} parent=1 // pred_check
      _
    $region11: #{tpu_custom_call.1} parent=1 // pred_check_branch
      %19 = sbr.rel (0) target = $region13
    $region12: #{tpu_custom_call.1} parent=1 // pred_region
      _
    $region13: #{tpu_custom_call.1} parent=1 // pred_fallthru
      _
    // Predicated region
    $region14: #{tpu_custom_call.1} parent=1 // pred_check
      _
    $region15: #{tpu_custom_call.1} parent=1 // pred_check_branch
      %21 = sbr.rel (0) target = $region17
    $region16: #{tpu_custom_call.1} parent=1 // pred_region
      _
    $region17: #{tpu_custom_call.1} parent=1 // pred_fallthru
      _
    // Predicated region
    $region18: #{tpu_custom_call.1} parent=1 // pred_check
      _
    $region19: #{tpu_custom_call.1} parent=1 // pred_check_branch
      %23 = sbr.rel (0) target = $region21
    $region20: #{tpu_custom_call.1} parent=1 // pred_region
      _
    $region21: #{tpu_custom_call.1} parent=1 // pred_fallthru
      _
    // Predicated region
    $region22: #{tpu_custom_call.1} parent=1 // pred_check
      _
    $region23: #{tpu_custom_call.1} parent=1 // pred_check_branch
      %25 = sbr.rel (0) target = $region25
    $region24: #{tpu_custom_call.1} parent=1 // pred_region
      _
    $region25: #{tpu_custom_call.1} parent=1 // pred_fallthru
      _
    // Predicated region
    $region26: #{tpu_custom_call.1} parent=1 // pred_check
      _
    $region27: #{tpu_custom_call.1} parent=1 // pred_check_branch
      %27 = sbr.rel (0) target = $region29
    $region28: #{tpu_custom_call.1} parent=1 // pred_region
      _
    $region29: #{tpu_custom_call.1} parent=1 // pred_fallthru
      _
    // Predicated region
    $region30: #{tpu_custom_call.1} parent=1 // pred_check
      _
    $region31: #{tpu_custom_call.1} parent=1 // pred_check_branch
      %29 = sbr.rel (0) target = $region33
    $region32: #{tpu_custom_call.1} parent=1 // pred_region
      _
    $region33: #{tpu_custom_call.1} parent=1 // pred_fallthru
      _
    %v30 = vld [vmem:[%s2] sm:$0xff]
    %v31 = vld [vmem:[%s2 + $0x8] sm:$0xff]
    %v32 = vld [vmem:[%s2 + $0x10] sm:$0xff]
    %v33 = vld [vmem:[%s2 + $0x18] sm:$0xff]
    %v34 = vld [vmem:[%s2 + $0x20] sm:$0xff]
    %v35 = vld [vmem:[%s2 + $0x28] sm:$0xff]
    %v36 = vld [vmem:[%s2 + $0x30] sm:$0xff]
    %v37 = vld [vmem:[%s2 + $0x38] sm:$0xff]
    %v38 = vld [vmem:[%s2 + $0x40] sm:$0xff]
    %v39 = vld [vmem:[%s2 + $0x48] sm:$0xff]
    %v40 = vld [vmem:[%s2 + $0x50] sm:$0xff]
    %v41 = vld [vmem:[%s2 + $0x58] sm:$0xff]
    %v42 = vld [vmem:[%s2 + $0x60] sm:$0xff]
    %v43 = vld [vmem:[%s2 + $0x68] sm:$0xff]
    %v44 = vld [vmem:[%s2 + $0x70] sm:$0xff]
    %v45 = vld [vmem:[%s2 + $0x78] sm:$0xff]
    %v46 = vld [vmem:[%s4] sm:$0xff]
    %v47 = vld [vmem:[%s4 + $0x8] sm:$0xff]
    %v48 = vld [vmem:[%s4 + $0x10] sm:$0xff]
    %v49 = vld [vmem:[%s4 + $0x18] sm:$0xff]
    %v50 = vld [vmem:[%s4 + $0x20] sm:$0xff]
    %v51 = vld [vmem:[%s4 + $0x28] sm:$0xff]
    %v52 = vld [vmem:[%s4 + $0x30] sm:$0xff]
    %v53 = vld [vmem:[%s4 + $0x38] sm:$0xff]
    %v54 = vld [vmem:[%s3] sm:$0x1]
    %v55 = vld [vmem:[%s5] sm:$0x1]
    %v56 = vld [vmem:[%s6] sm:$0x1]
    %v57 = vld [vmem:[%s7] sm:$0x1]
    %v58 = vld [vmem:[%s0] sm:$0xff]
    %v59 = vld [vmem:[%s0 + $0x8] sm:$0xff]
    %v60 = vld [vmem:[%s0 + $0x10] sm:$0xff]
    %v61 = vld [vmem:[%s0 + $0x18] sm:$0xff]
    %v62 = vld [vmem:[%s0 + $0x20] sm:$0xff]
    %v63 = vld [vmem:[%s0 + $0x28] sm:$0xff]
    %v64 = vld [vmem:[%s0 + $0x30] sm:$0xff]
    %v65 = vld [vmem:[%s0 + $0x38] sm:$0xff]
    %v66 = vld [vmem:[%s0 + $0x40] sm:$0xff]
    %v67 = vld [vmem:[%s0 + $0x48] sm:$0xff]
    %v68 = vld [vmem:[%s0 + $0x50] sm:$0xff]
    %v69 = vld [vmem:[%s0 + $0x58] sm:$0xff]
    %v70 = vld [vmem:[%s0 + $0x60] sm:$0xff]
    %v71 = vld [vmem:[%s0 + $0x68] sm:$0xff]
    %v72 = vld [vmem:[%s0 + $0x70] sm:$0xff]
    %v73 = vld [vmem:[%s0 + $0x78] sm:$0xff]
    %v75 = vlaneseq
    %v76 = vshrl.u32 %v75, 7
    %v77 = vsub.s32 0, %v76
    %v78 = vrot.slane %v54, %v77
    %80 = vmatprep.subr.mxu0 0.0
    %81 = vmatpush1.msra.mxu0 %v30
    %82 = vmatprep.subr.mxu0 0.0
    %83 = vmatpush1.msra.mxu0 %v31
    %84 = vmatprep.subr.mxu0 0.0
    %85 = vmatpush1.msra.mxu0 %v32
    %86 = vmatprep.subr.mxu0 0.0
    %87 = vmatpush1.msra.mxu0 %v33
    %88 = vmatprep.subr.mxu0 0.0
    %89 = vmatpush1.msra.mxu0 %v34
    %90 = vmatprep.subr.mxu0 0.0
    %91 = vmatpush1.msra.mxu0 %v35
    %92 = vmatprep.subr.mxu0 0.0
    %93 = vmatpush1.msra.mxu0 %v36
    %94 = vmatprep.subr.mxu0 0.0
    %95 = vmatpush1.msra.mxu0 %v37
    %96 = vmatprep.subr.mxu0 0.0
    %97 = vmatpush1.msra.mxu0 %v38
    %98 = vmatprep.subr.mxu0 0.0
    %99 = vmatpush1.msra.mxu0 %v39
    %100 = vmatprep.subr.mxu0 0.0
    %101 = vmatpush1.msra.mxu0 %v40
    %102 = vmatprep.subr.mxu0 0.0
    %103 = vmatpush1.msra.mxu0 %v41
    %104 = vmatprep.subr.mxu0 0.0
    %105 = vmatpush1.msra.mxu0 %v42
    %106 = vmatprep.subr.mxu0 0.0
    %107 = vmatpush1.msra.mxu0 %v43
    %108 = vmatprep.subr.mxu0 0.0
    %109 = vmatpush1.msra.mxu0 %v44
    %110 = vmatprep.subr.mxu0 0.0
    %111 = vmatpush1.msra.mxu0 %v45
    %112 = vmatprep.subr.mxu0 0.0
    %113 = vmatpush1.msra.mxu0 0.0
    %114 = vmatprep.subr.mxu0 0.0
    %115 = vmatpush1.msra.mxu0 0.0
    %116 = vmatprep.subr.mxu0 0.0
    %117 = vmatpush1.msra.mxu0 0.0
    %118 = vmatprep.subr.mxu0 0.0
    %119 = vmatpush1.msra.mxu0 0.0
    %120 = vmatprep.subr.mxu0 0.0
    %121 = vmatpush1.msra.mxu0 0.0
    %122 = vmatprep.subr.mxu0 0.0
    %123 = vmatpush1.msra.mxu0 0.0
    %124 = vmatprep.subr.mxu0 0.0
    %125 = vmatpush1.msra.mxu0 0.0
    %126 = vmatprep.subr.mxu0 0.0
    %127 = vmatpush1.msra.mxu0 0.0
    %128 = vmatprep.subr.mxu0 0.0
    %129 = vmatpush1.msra.mxu0 0.0
    %130 = vmatprep.subr.mxu0 0.0
    %131 = vmatpush1.msra.mxu0 0.0
    %132 = vmatprep.subr.mxu0 0.0
    %133 = vmatpush1.msra.mxu0 0.0
    %134 = vmatprep.subr.mxu0 0.0
    %135 = vmatpush1.msra.mxu0 0.0
    %136 = vmatprep.subr.mxu0 0.0
    %137 = vmatpush1.msra.mxu0 0.0
    %138 = vmatprep.subr.mxu0 0.0
    %139 = vmatpush1.msra.mxu0 0.0
    %140 = vmatprep.subr.mxu0 0.0
    %141 = vmatpush1.msra.mxu0 0.0
    %142 = vmatprep.subr.mxu0 0.0
    %143 = vmatpush1.msra.mxu0 0.0
    %144 = vmatprep.mubr.f32.mxu0 0.0
    %145 = vmatmul.mubr.f32.gmra.mrb[0].mxu0 %v58
    %v146 = vpop.f32.mrb[0].mxu0
    %v147 = vadd.f32 %v78, %v146
    %v148 = vpop.f32.mrb[0].mxu0
    %149 = vmatprep.mubr.f32.mxu0 0.0
    %150 = vmatmul.mubr.f32.gmra.mrb[0].mxu0 %v59
    %v151 = vpop.f32.mrb[0].mxu0
    %v152 = vadd.f32 %v78, %v151
    %v153 = vpop.f32.mrb[0].mxu0
    %154 = vmatprep.mubr.f32.mxu0 0.0
    %155 = vmatmul.mubr.f32.gmra.mrb[0].mxu0 %v60
    %v156 = vpop.f32.mrb[0].mxu0
    %v157 = vadd.f32 %v78, %v156
    %v158 = vpop.f32.mrb[0].mxu0
    %159 = vmatprep.mubr.f32.mxu0 0.0
    %160 = vmatmul.mubr.f32.gmra.mrb[0].mxu0 %v61
    %v161 = vpop.f32.mrb[0].mxu0
    %v162 = vadd.f32 %v78, %v161
    %v163 = vpop.f32.mrb[0].mxu0
    %164 = vmatprep.mubr.f32.mxu0 0.0
    %165 = vmatmul.mubr.f32.gmra.mrb[0].mxu0 %v62
    %v166 = vpop.f32.mrb[0].mxu0
    %v167 = vadd.f32 %v78, %v166
    %v168 = vpop.f32.mrb[0].mxu0
    %169 = vmatprep.mubr.f32.mxu0 0.0
    %170 = vmatmul.mubr.f32.gmra.mrb[0].mxu0 %v63
    %v171 = vpop.f32.mrb[0].mxu0
    %v172 = vadd.f32 %v78, %v171
    %v173 = vpop.f32.mrb[0].mxu0
    %174 = vmatprep.mubr.f32.mxu0 0.0
    %175 = vmatmul.mubr.f32.gmra.mrb[0].mxu0 %v64
    %v176 = vpop.f32.mrb[0].mxu0
    %v177 = vadd.f32 %v78, %v176
    %v178 = vpop.f32.mrb[0].mxu0
    %179 = vmatprep.mubr.f32.mxu0 0.0
    %180 = vmatmul.mubr.f32.gmra.mrb[0].mxu0 %v65
    %v181 = vpop.f32.mrb[0].mxu0
    %v182 = vadd.f32 %v78, %v181
    %v183 = vpop.f32.mrb[0].mxu0
    %184 = vmatprep.mubr.f32.mxu0 0.0
    %185 = vmatmul.mubr.f32.gmra.mrb[0].mxu0 %v66
    %v186 = vpop.f32.mrb[0].mxu0
    %v187 = vadd.f32 %v78, %v186
    %v188 = vpop.f32.mrb[0].mxu0
    %189 = vmatprep.mubr.f32.mxu0 0.0
    %190 = vmatmul.mubr.f32.gmra.mrb[0].mxu0 %v67
    %v191 = vpop.f32.mrb[0].mxu0
    %v192 = vadd.f32 %v78, %v191
    %v193 = vpop.f32.mrb[0].mxu0
    %194 = vmatprep.mubr.f32.mxu0 0.0
    %195 = vmatmul.mubr.f32.gmra.mrb[0].mxu0 %v68
    %v196 = vpop.f32.mrb[0].mxu0
    %v197 = vadd.f32 %v78, %v196
    %v198 = vpop.f32.mrb[0].mxu0
    %199 = vmatprep.mubr.f32.mxu0 0.0
    %200 = vmatmul.mubr.f32.gmra.mrb[0].mxu0 %v69
    %v201 = vpop.f32.mrb[0].mxu0
    %v202 = vadd.f32 %v78, %v201
    %v203 = vpop.f32.mrb[0].mxu0
    %204 = vmatprep.mubr.f32.mxu0 0.0
    %205 = vmatmul.mubr.f32.gmra.mrb[0].mxu0 %v70
    %v206 = vpop.f32.mrb[0].mxu0
    %v207 = vadd.f32 %v78, %v206
    %v208 = vpop.f32.mrb[0].mxu0
    %209 = vmatprep.mubr.f32.mxu0 0.0
    %210 = vmatmul.mubr.f32.gmra.mrb[0].mxu0 %v71
    %v211 = vpop.f32.mrb[0].mxu0
    %v212 = vadd.f32 %v78, %v211
    %v213 = vpop.f32.mrb[0].mxu0
    %214 = vmatprep.mubr.f32.mxu0 0.0
    %215 = vmatmul.mubr.f32.gmra.mrb[0].mxu0 %v72
    %v216 = vpop.f32.mrb[0].mxu0
    %v217 = vadd.f32 %v78, %v216
    %v218 = vpop.f32.mrb[0].mxu0
    %219 = vmatprep.mubr.f32.mxu0 0.0
    %220 = vmatmul.mubr.f32.gmra.mrb[0].mxu0 %v73
    %v221 = vpop.f32.mrb[0].mxu0
    %v222 = vadd.f32 %v78, %v221
    %v223 = vpop.f32.mrb[0].mxu0
    %224 = vdwg.mxu0
    %v225 = vmul.f32 %v147, %v147
    %v226 = vmul.f32 %v152, %v152
    %v227 = vmul.f32 %v157, %v157
    %v228 = vmul.f32 %v162, %v162
    %v229 = vmul.f32 %v167, %v167
    %v230 = vmul.f32 %v172, %v172
    %v231 = vmul.f32 %v177, %v177
    %v232 = vmul.f32 %v182, %v182
    %v233 = vmul.f32 %v187, %v187
    %v234 = vmul.f32 %v192, %v192
    %v235 = vmul.f32 %v197, %v197
    %v236 = vmul.f32 %v202, %v202
    %v237 = vmul.f32 %v207, %v207
    %v238 = vmul.f32 %v212, %v212
    %v239 = vmul.f32 %v217, %v217
    %v240 = vmul.f32 %v222, %v222
    %vm241 = vcmask 523264
    %v242 = vsel %vm241, %v225, 0.0
    %243 = vadd.xlane.f32.xlu0 %v242
    %v244 = vpop.xlane.xlu0 %243
    %v245 = vsel %vm241, %v226, 0.0
    %246 = vadd.xlane.f32.xlu0 %v245
    %v247 = vpop.xlane.xlu0 %246
    %v248 = vsel %vm241, %v227, 0.0
    %249 = vadd.xlane.f32.xlu0 %v248
    %v250 = vpop.xlane.xlu0 %249
    %v251 = vsel %vm241, %v228, 0.0
    %252 = vadd.xlane.f32.xlu0 %v251
    %v253 = vpop.xlane.xlu0 %252
    %v254 = vsel %vm241, %v229, 0.0
    %255 = vadd.xlane.f32.xlu0 %v254
    %v256 = vpop.xlane.xlu0 %255
    %v257 = vsel %vm241, %v230, 0.0
    %258 = vadd.xlane.f32.xlu0 %v257
    %v259 = vpop.xlane.xlu0 %258
    %v260 = vsel %vm241, %v231, 0.0
    %261 = vadd.xlane.f32.xlu0 %v260
    %v262 = vpop.xlane.xlu0 %261
    %v263 = vsel %vm241, %v232, 0.0
    %264 = vadd.xlane.f32.xlu0 %v263
    %v265 = vpop.xlane.xlu0 %264
    %v266 = vsel %vm241, %v233, 0.0
    %267 = vadd.xlane.f32.xlu0 %v266
    %v268 = vpop.xlane.xlu0 %267
    %v269 = vsel %vm241, %v234, 0.0
    %270 = vadd.xlane.f32.xlu0 %v269
    %v271 = vpop.xlane.xlu0 %270
    %v272 = vsel %vm241, %v235, 0.0
    %273 = vadd.xlane.f32.xlu0 %v272
    %v274 = vpop.xlane.xlu0 %273
    %v275 = vsel %vm241, %v236, 0.0
    %276 = vadd.xlane.f32.xlu0 %v275
    %v277 = vpop.xlane.xlu0 %276
    %v278 = vsel %vm241, %v237, 0.0
    %279 = vadd.xlane.f32.xlu0 %v278
    %v280 = vpop.xlane.xlu0 %279
    %v281 = vsel %vm241, %v238, 0.0
    %282 = vadd.xlane.f32.xlu0 %v281
    %v283 = vpop.xlane.xlu0 %282
    %v284 = vsel %vm241, %v239, 0.0
    %285 = vadd.xlane.f32.xlu0 %v284
    %v286 = vpop.xlane.xlu0 %285
    %v287 = vsel %vm241, %v240, 0.0
    %288 = vadd.xlane.f32.xlu0 %v287
    %v289 = vpop.xlane.xlu0 %288
    %v290 = vmax.f32 %v244, 1e-24
    %v291 = vmax.f32 %v247, 1e-24
    %v292 = vmax.f32 %v250, 1e-24
    %v293 = vmax.f32 %v253, 1e-24
    %v294 = vmax.f32 %v256, 1e-24
    %v295 = vmax.f32 %v259, 1e-24
    %v296 = vmax.f32 %v262, 1e-24
    %v297 = vmax.f32 %v265, 1e-24
    %v298 = vmax.f32 %v268, 1e-24
    %v299 = vmax.f32 %v271, 1e-24
    %v300 = vmax.f32 %v274, 1e-24
    %v301 = vmax.f32 %v277, 1e-24
    %v302 = vmax.f32 %v280, 1e-24
    %v303 = vmax.f32 %v283, 1e-24
    %v304 = vmax.f32 %v286, 1e-24
    %v305 = vmax.f32 %v289, 1e-24
    %v306 = vrsqrt.pop %v290
    %v307 = vrsqrt.pop %v291
    %v308 = vrsqrt.pop %v292
    %v309 = vrsqrt.pop %v293
    %v310 = vrsqrt.pop %v294
    %v311 = vrsqrt.pop %v295
    %v312 = vrsqrt.pop %v296
    %v313 = vrsqrt.pop %v297
    %v314 = vrsqrt.pop %v298
    %v315 = vrsqrt.pop %v299
    %v316 = vrsqrt.pop %v300
    %v317 = vrsqrt.pop %v301
    %v318 = vrsqrt.pop %v302
    %v319 = vrsqrt.pop %v303
    %v320 = vrsqrt.pop %v304
    %v321 = vrsqrt.pop %v305
    %v322 = vmul.f32 %v147, %v306
    %v323 = vmul.f32 %v152, %v307
    %v324 = vmul.f32 %v157, %v308
    %v325 = vmul.f32 %v162, %v309
    %v326 = vmul.f32 %v167, %v310
    %v327 = vmul.f32 %v172, %v311
    %v328 = vmul.f32 %v177, %v312
    %v329 = vmul.f32 %v182, %v313
    %v330 = vmul.f32 %v187, %v314
    %v331 = vmul.f32 %v192, %v315
    %v332 = vmul.f32 %v197, %v316
    %v333 = vmul.f32 %v202, %v317
    %v334 = vmul.f32 %v207, %v318
    %v335 = vmul.f32 %v212, %v319
    %v336 = vmul.f32 %v217, %v320
    %v337 = vmul.f32 %v222, %v321
    %v339 = vlaneseq
    %v340 = vshrl.u32 %v339, 7
    %v341 = vsub.s32 0, %v340
    %v342 = vrot.slane %v55, %v341
    %v345 = vsel %vm241, %v322, 0
    %v348 = vsel %vm241, %v323, 0
    %v351 = vsel %vm241, %v324, 0
    %v354 = vsel %vm241, %v325, 0
    %v357 = vsel %vm241, %v326, 0
    %v360 = vsel %vm241, %v327, 0
    %v363 = vsel %vm241, %v328, 0
    %v366 = vsel %vm241, %v329, 0
    %v369 = vsel %vm241, %v330, 0
    %v372 = vsel %vm241, %v331, 0
    %v375 = vsel %vm241, %v332, 0
    %v378 = vsel %vm241, %v333, 0
    %v381 = vsel %vm241, %v334, 0
    %v384 = vsel %vm241, %v335, 0
    %v387 = vsel %vm241, %v336, 0
    %v390 = vsel %vm241, %v337, 0
    %392 = vmatprep.subr.mxu0 0.0
    %393 = vmatpush1.msra.mxu0 %v46
    %394 = vmatprep.subr.mxu0 0.0
    %395 = vmatpush1.msra.mxu0 %v47
    %396 = vmatprep.subr.mxu0 0.0
    %397 = vmatpush1.msra.mxu0 %v48
    %398 = vmatprep.subr.mxu0 0.0
    %399 = vmatpush1.msra.mxu0 %v49
    %400 = vmatprep.subr.mxu0 0.0
    %401 = vmatpush1.msra.mxu0 %v50
    %402 = vmatprep.subr.mxu0 0.0
    %403 = vmatpush1.msra.mxu0 %v51
    %404 = vmatprep.subr.mxu0 0.0
    %405 = vmatpush1.msra.mxu0 %v52
    %406 = vmatprep.subr.mxu0 0.0
    %407 = vmatpush1.msra.mxu0 %v53
    %408 = vmatprep.subr.mxu0 0.0
    %409 = vmatpush1.msra.mxu0 0.0
    %410 = vmatprep.subr.mxu0 0.0
    %411 = vmatpush1.msra.mxu0 0.0
    %412 = vmatprep.subr.mxu0 0.0
    %413 = vmatpush1.msra.mxu0 0.0
    %414 = vmatprep.subr.mxu0 0.0
    %415 = vmatpush1.msra.mxu0 0.0
    %416 = vmatprep.subr.mxu0 0.0
    %417 = vmatpush1.msra.mxu0 0.0
    %418 = vmatprep.subr.mxu0 0.0
    %419 = vmatpush1.msra.mxu0 0.0
    %420 = vmatprep.subr.mxu0 0.0
    %421 = vmatpush1.msra.mxu0 0.0
    %422 = vmatprep.subr.mxu0 0.0
    %423 = vmatpush1.msra.mxu0 0.0
    %424 = vmatprep.subr.mxu0 0.0
    %425 = vmatpush1.msra.mxu0 0.0
    %426 = vmatprep.subr.mxu0 0.0
    %427 = vmatpush1.msra.mxu0 0.0
    %428 = vmatprep.subr.mxu0 0.0
    %429 = vmatpush1.msra.mxu0 0.0
    %430 = vmatprep.subr.mxu0 0.0
    %431 = vmatpush1.msra.mxu0 0.0
    %432 = vmatprep.subr.mxu0 0.0
    %433 = vmatpush1.msra.mxu0 0.0
    %434 = vmatprep.subr.mxu0 0.0
    %435 = vmatpush1.msra.mxu0 0.0
    %436 = vmatprep.subr.mxu0 0.0
    %437 = vmatpush1.msra.mxu0 0.0
    %438 = vmatprep.subr.mxu0 0.0
    %439 = vmatpush1.msra.mxu0 0.0
    %440 = vmatprep.subr.mxu0 0.0
    %441 = vmatpush1.msra.mxu0 0.0
    %442 = vmatprep.subr.mxu0 0.0
    %443 = vmatpush1.msra.mxu0 0.0
    %444 = vmatprep.subr.mxu0 0.0
    %445 = vmatpush1.msra.mxu0 0.0
    %446 = vmatprep.subr.mxu0 0.0
    %447 = vmatpush1.msra.mxu0 0.0
    %448 = vmatprep.subr.mxu0 0.0
    %449 = vmatpush1.msra.mxu0 0.0
    %450 = vmatprep.subr.mxu0 0.0
    %451 = vmatpush1.msra.mxu0 0.0
    %452 = vmatprep.subr.mxu0 0.0
    %453 = vmatpush1.msra.mxu0 0.0
    %454 = vmatprep.subr.mxu0 0.0
    %455 = vmatpush1.msra.mxu0 0.0
    %456 = vmatprep.mubr.f32.mxu0 0.0
    %457 = vmatmul.mubr.f32.gmra.mrb[0].mxu0 %v345
    %v458 = vpop.f32.mrb[0].mxu0
    %v459 = vadd.f32 %v342, %v458
    %v460 = vpop.f32.mrb[0].mxu0
    %461 = vmatprep.mubr.f32.mxu0 0.0
    %462 = vmatmul.mubr.f32.gmra.mrb[0].mxu0 %v348
    %v463 = vpop.f32.mrb[0].mxu0
    %v464 = vadd.f32 %v342, %v463
    %v465 = vpop.f32.mrb[0].mxu0
    %466 = vmatprep.mubr.f32.mxu0 0.0
    %467 = vmatmul.mubr.f32.gmra.mrb[0].mxu0 %v351
    %v468 = vpop.f32.mrb[0].mxu0
    %v469 = vadd.f32 %v342, %v468
    %v470 = vpop.f32.mrb[0].mxu0
    %471 = vmatprep.mubr.f32.mxu0 0.0
    %472 = vmatmul.mubr.f32.gmra.mrb[0].mxu0 %v354
    %v473 = vpop.f32.mrb[0].mxu0
    %v474 = vadd.f32 %v342, %v473
    %v475 = vpop.f32.mrb[0].mxu0
    %476 = vmatprep.mubr.f32.mxu0 0.0
    %477 = vmatmul.mubr.f32.gmra.mrb[0].mxu0 %v357
    %v478 = vpop.f32.mrb[0].mxu0
    %v479 = vadd.f32 %v342, %v478
    %v480 = vpop.f32.mrb[0].mxu0
    %481 = vmatprep.mubr.f32.mxu0 0.0
    %482 = vmatmul.mubr.f32.gmra.mrb[0].mxu0 %v360
    %v483 = vpop.f32.mrb[0].mxu0
    %v484 = vadd.f32 %v342, %v483
    %v485 = vpop.f32.mrb[0].mxu0
    %486 = vmatprep.mubr.f32.mxu0 0.0
    %487 = vmatmul.mubr.f32.gmra.mrb[0].mxu0 %v363
    %v488 = vpop.f32.mrb[0].mxu0
    %v489 = vadd.f32 %v342, %v488
    %v490 = vpop.f32.mrb[0].mxu0
    %491 = vmatprep.mubr.f32.mxu0 0.0
    %492 = vmatmul.mubr.f32.gmra.mrb[0].mxu0 %v366
    %v493 = vpop.f32.mrb[0].mxu0
    %v494 = vadd.f32 %v342, %v493
    %v495 = vpop.f32.mrb[0].mxu0
    %496 = vmatprep.mubr.f32.mxu0 0.0
    %497 = vmatmul.mubr.f32.gmra.mrb[0].mxu0 %v369
    %v498 = vpop.f32.mrb[0].mxu0
    %v499 = vadd.f32 %v342, %v498
    %v500 = vpop.f32.mrb[0].mxu0
    %501 = vmatprep.mubr.f32.mxu0 0.0
    %502 = vmatmul.mubr.f32.gmra.mrb[0].mxu0 %v372
    %v503 = vpop.f32.mrb[0].mxu0
    %v504 = vadd.f32 %v342, %v503
    %v505 = vpop.f32.mrb[0].mxu0
    %506 = vmatprep.mubr.f32.mxu0 0.0
    %507 = vmatmul.mubr.f32.gmra.mrb[0].mxu0 %v375
    %v508 = vpop.f32.mrb[0].mxu0
    %v509 = vadd.f32 %v342, %v508
    %v510 = vpop.f32.mrb[0].mxu0
    %511 = vmatprep.mubr.f32.mxu0 0.0
    %512 = vmatmul.mubr.f32.gmra.mrb[0].mxu0 %v378
    %v513 = vpop.f32.mrb[0].mxu0
    %v514 = vadd.f32 %v342, %v513
    %v515 = vpop.f32.mrb[0].mxu0
    %516 = vmatprep.mubr.f32.mxu0 0.0
    %517 = vmatmul.mubr.f32.gmra.mrb[0].mxu0 %v381
    %v518 = vpop.f32.mrb[0].mxu0
    %v519 = vadd.f32 %v342, %v518
    %v520 = vpop.f32.mrb[0].mxu0
    %521 = vmatprep.mubr.f32.mxu0 0.0
    %522 = vmatmul.mubr.f32.gmra.mrb[0].mxu0 %v384
    %v523 = vpop.f32.mrb[0].mxu0
    %v524 = vadd.f32 %v342, %v523
    %v525 = vpop.f32.mrb[0].mxu0
    %526 = vmatprep.mubr.f32.mxu0 0.0
    %527 = vmatmul.mubr.f32.gmra.mrb[0].mxu0 %v387
    %v528 = vpop.f32.mrb[0].mxu0
    %v529 = vadd.f32 %v342, %v528
    %v530 = vpop.f32.mrb[0].mxu0
    %531 = vmatprep.mubr.f32.mxu0 0.0
    %532 = vmatmul.mubr.f32.gmra.mrb[0].mxu0 %v390
    %v533 = vpop.f32.mrb[0].mxu0
    %v534 = vadd.f32 %v342, %v533
    %v535 = vpop.f32.mrb[0].mxu0
    %536 = vdwg.mxu0
    %v537 = vld [vmem:[%s1] sm:$0xff]
    %v538 = vld [vmem:[%s1 + $0x8] sm:$0xff]
    %v539 = vld [vmem:[%s1 + $0x10] sm:$0xff]
    %v540 = vld [vmem:[%s1 + $0x18] sm:$0xff]
    %v541 = vld [vmem:[%s1 + $0x20] sm:$0xff]
    %v542 = vld [vmem:[%s1 + $0x28] sm:$0xff]
    %v543 = vld [vmem:[%s1 + $0x30] sm:$0xff]
    %v544 = vld [vmem:[%s1 + $0x38] sm:$0xff]
    %v545 = vld [vmem:[%s1 + $0x40] sm:$0xff]
    %v546 = vld [vmem:[%s1 + $0x48] sm:$0xff]
    %v547 = vld [vmem:[%s1 + $0x50] sm:$0xff]
    %v548 = vld [vmem:[%s1 + $0x58] sm:$0xff]
    %v549 = vld [vmem:[%s1 + $0x60] sm:$0xff]
    %v550 = vld [vmem:[%s1 + $0x68] sm:$0xff]
    %v551 = vld [vmem:[%s1 + $0x70] sm:$0xff]
    %v552 = vld [vmem:[%s1 + $0x78] sm:$0xff]
    %553 = vmatprep.subr.mxu0 0.0
    %554 = vmatpush1.msra.mxu0 %v30
    %555 = vmatprep.subr.mxu0 0.0
    %556 = vmatpush1.msra.mxu0 %v31
    %557 = vmatprep.subr.mxu0 0.0
    %558 = vmatpush1.msra.mxu0 %v32
    %559 = vmatprep.subr.mxu0 0.0
    %560 = vmatpush1.msra.mxu0 %v33
    %561 = vmatprep.subr.mxu0 0.0
    %562 = vmatpush1.msra.mxu0 %v34
    %563 = vmatprep.subr.mxu0 0.0
    %564 = vmatpush1.msra.mxu0 %v35
    %565 = vmatprep.subr.mxu0 0.0
    %566 = vmatpush1.msra.mxu0 %v36
    %567 = vmatprep.subr.mxu0 0.0
    %568 = vmatpush1.msra.mxu0 %v37
    %569 = vmatprep.subr.mxu0 0.0
    %570 = vmatpush1.msra.mxu0 %v38
    %571 = vmatprep.subr.mxu0 0.0
    %572 = vmatpush1.msra.mxu0 %v39
    %573 = vmatprep.subr.mxu0 0.0
    %574 = vmatpush1.msra.mxu0 %v40
    %575 = vmatprep.subr.mxu0 0.0
    %576 = vmatpush1.msra.mxu0 %v41
    %577 = vmatprep.subr.mxu0 0.0
    %578 = vmatpush1.msra.mxu0 %v42
    %579 = vmatprep.subr.mxu0 0.0
    %580 = vmatpush1.msra.mxu0 %v43
    %581 = vmatprep.subr.mxu0 0.0
    %582 = vmatpush1.msra.mxu0 %v44
    %583 = vmatprep.subr.mxu0 0.0
    %584 = vmatpush1.msra.mxu0 %v45
    %585 = vmatprep.subr.mxu0 0.0
    %586 = vmatpush1.msra.mxu0 0.0
    %587 = vmatprep.subr.mxu0 0.0
    %588 = vmatpush1.msra.mxu0 0.0
    %589 = vmatprep.subr.mxu0 0.0
    %590 = vmatpush1.msra.mxu0 0.0
    %591 = vmatprep.subr.mxu0 0.0
    %592 = vmatpush1.msra.mxu0 0.0
    %593 = vmatprep.subr.mxu0 0.0
    %594 = vmatpush1.msra.mxu0 0.0
    %595 = vmatprep.subr.mxu0 0.0
    %596 = vmatpush1.msra.mxu0 0.0
    %597 = vmatprep.subr.mxu0 0.0
    %598 = vmatpush1.msra.mxu0 0.0
    %599 = vmatprep.subr.mxu0 0.0
    %600 = vmatpush1.msra.mxu0 0.0
    %601 = vmatprep.subr.mxu0 0.0
    %602 = vmatpush1.msra.mxu0 0.0
    %603 = vmatprep.subr.mxu0 0.0
    %604 = vmatpush1.msra.mxu0 0.0
    %605 = vmatprep.subr.mxu0 0.0
    %606 = vmatpush1.msra.mxu0 0.0
    %607 = vmatprep.subr.mxu0 0.0
    %608 = vmatpush1.msra.mxu0 0.0
    %609 = vmatprep.subr.mxu0 0.0
    %610 = vmatpush1.msra.mxu0 0.0
    %611 = vmatprep.subr.mxu0 0.0
    %612 = vmatpush1.msra.mxu0 0.0
    %613 = vmatprep.subr.mxu0 0.0
    %614 = vmatpush1.msra.mxu0 0.0
    %615 = vmatprep.subr.mxu0 0.0
    %616 = vmatpush1.msra.mxu0 0.0
    %617 = vmatprep.mubr.f32.mxu0 0.0
    %618 = vmatmul.mubr.f32.gmra.mrb[0].mxu0 %v537
    %v619 = vpop.f32.mrb[0].mxu0
    %v620 = vadd.f32 %v78, %v619
    %v621 = vpop.f32.mrb[0].mxu0
    %622 = vmatprep.mubr.f32.mxu0 0.0
    %623 = vmatmul.mubr.f32.gmra.mrb[0].mxu0 %v538
    %v624 = vpop.f32.mrb[0].mxu0
    %v625 = vadd.f32 %v78, %v624
    %v626 = vpop.f32.mrb[0].mxu0
    %627 = vmatprep.mubr.f32.mxu0 0.0
    %628 = vmatmul.mubr.f32.gmra.mrb[0].mxu0 %v539
    %v629 = vpop.f32.mrb[0].mxu0
    %v630 = vadd.f32 %v78, %v629
    %v631 = vpop.f32.mrb[0].mxu0
    %632 = vmatprep.mubr.f32.mxu0 0.0
    %633 = vmatmul.mubr.f32.gmra.mrb[0].mxu0 %v540
    %v634 = vpop.f32.mrb[0].mxu0
    %v635 = vadd.f32 %v78, %v634
    %v636 = vpop.f32.mrb[0].mxu0
    %637 = vmatprep.mubr.f32.mxu0 0.0
    %638 = vmatmul.mubr.f32.gmra.mrb[0].mxu0 %v541
    %v639 = vpop.f32.mrb[0].mxu0
    %v640 = vadd.f32 %v78, %v639
    %v641 = vpop.f32.mrb[0].mxu0
    %642 = vmatprep.mubr.f32.mxu0 0.0
    %643 = vmatmul.mubr.f32.gmra.mrb[0].mxu0 %v542
    %v644 = vpop.f32.mrb[0].mxu0
    %v645 = vadd.f32 %v78, %v644
    %v646 = vpop.f32.mrb[0].mxu0
    %647 = vmatprep.mubr.f32.mxu0 0.0
    %648 = vmatmul.mubr.f32.gmra.mrb[0].mxu0 %v543
    %v649 = vpop.f32.mrb[0].mxu0
    %v650 = vadd.f32 %v78, %v649
    %v651 = vpop.f32.mrb[0].mxu0
    %652 = vmatprep.mubr.f32.mxu0 0.0
    %653 = vmatmul.mubr.f32.gmra.mrb[0].mxu0 %v544
    %v654 = vpop.f32.mrb[0].mxu0
    %v655 = vadd.f32 %v78, %v654
    %v656 = vpop.f32.mrb[0].mxu0
    %657 = vmatprep.mubr.f32.mxu0 0.0
    %658 = vmatmul.mubr.f32.gmra.mrb[0].mxu0 %v545
    %v659 = vpop.f32.mrb[0].mxu0
    %v660 = vadd.f32 %v78, %v659
    %v661 = vpop.f32.mrb[0].mxu0
    %662 = vmatprep.mubr.f32.mxu0 0.0
    %663 = vmatmul.mubr.f32.gmra.mrb[0].mxu0 %v546
    %v664 = vpop.f32.mrb[0].mxu0
    %v665 = vadd.f32 %v78, %v664
    %v666 = vpop.f32.mrb[0].mxu0
    %667 = vmatprep.mubr.f32.mxu0 0.0
    %668 = vmatmul.mubr.f32.gmra.mrb[0].mxu0 %v547
    %v669 = vpop.f32.mrb[0].mxu0
    %v670 = vadd.f32 %v78, %v669
    %v671 = vpop.f32.mrb[0].mxu0
    %672 = vmatprep.mubr.f32.mxu0 0.0
    %673 = vmatmul.mubr.f32.gmra.mrb[0].mxu0 %v548
    %v674 = vpop.f32.mrb[0].mxu0
    %v675 = vadd.f32 %v78, %v674
    %v676 = vpop.f32.mrb[0].mxu0
    %677 = vmatprep.mubr.f32.mxu0 0.0
    %678 = vmatmul.mubr.f32.gmra.mrb[0].mxu0 %v549
    %v679 = vpop.f32.mrb[0].mxu0
    %v680 = vadd.f32 %v78, %v679
    %v681 = vpop.f32.mrb[0].mxu0
    %682 = vmatprep.mubr.f32.mxu0 0.0
    %683 = vmatmul.mubr.f32.gmra.mrb[0].mxu0 %v550
    %v684 = vpop.f32.mrb[0].mxu0
    %v685 = vadd.f32 %v78, %v684
    %v686 = vpop.f32.mrb[0].mxu0
    %687 = vmatprep.mubr.f32.mxu0 0.0
    %688 = vmatmul.mubr.f32.gmra.mrb[0].mxu0 %v551
    %v689 = vpop.f32.mrb[0].mxu0
    %v690 = vadd.f32 %v78, %v689
    %v691 = vpop.f32.mrb[0].mxu0
    %692 = vmatprep.mubr.f32.mxu0 0.0
    %693 = vmatmul.mubr.f32.gmra.mrb[0].mxu0 %v552
    %v694 = vpop.f32.mrb[0].mxu0
    %v695 = vadd.f32 %v78, %v694
    %v696 = vpop.f32.mrb[0].mxu0
    %697 = vdwg.mxu0
    %v698 = vmul.f32 %v620, %v620
    %v699 = vmul.f32 %v625, %v625
    %v700 = vmul.f32 %v630, %v630
    %v701 = vmul.f32 %v635, %v635
    %v702 = vmul.f32 %v640, %v640
    %v703 = vmul.f32 %v645, %v645
    %v704 = vmul.f32 %v650, %v650
    %v705 = vmul.f32 %v655, %v655
    %v706 = vmul.f32 %v660, %v660
    %v707 = vmul.f32 %v665, %v665
    %v708 = vmul.f32 %v670, %v670
    %v709 = vmul.f32 %v675, %v675
    %v710 = vmul.f32 %v680, %v680
    %v711 = vmul.f32 %v685, %v685
    %v712 = vmul.f32 %v690, %v690
    %v713 = vmul.f32 %v695, %v695
    %v714 = vsel %vm241, %v698, 0.0
    %715 = vadd.xlane.f32.xlu0 %v714
    %v716 = vpop.xlane.xlu0 %715
    %v717 = vsel %vm241, %v699, 0.0
    %718 = vadd.xlane.f32.xlu0 %v717
    %v719 = vpop.xlane.xlu0 %718
    %v720 = vsel %vm241, %v700, 0.0
    %721 = vadd.xlane.f32.xlu0 %v720
    %v722 = vpop.xlane.xlu0 %721
    %v723 = vsel %vm241, %v701, 0.0
    %724 = vadd.xlane.f32.xlu0 %v723
    %v725 = vpop.xlane.xlu0 %724
    %v726 = vsel %vm241, %v702, 0.0
    %727 = vadd.xlane.f32.xlu0 %v726
    %v728 = vpop.xlane.xlu0 %727
    %v729 = vsel %vm241, %v703, 0.0
    %730 = vadd.xlane.f32.xlu0 %v729
    %v731 = vpop.xlane.xlu0 %730
    %v732 = vsel %vm241, %v704, 0.0
    %733 = vadd.xlane.f32.xlu0 %v732
    %v734 = vpop.xlane.xlu0 %733
    %v735 = vsel %vm241, %v705, 0.0
    %736 = vadd.xlane.f32.xlu0 %v735
    %v737 = vpop.xlane.xlu0 %736
    %v738 = vsel %vm241, %v706, 0.0
    %739 = vadd.xlane.f32.xlu0 %v738
    %v740 = vpop.xlane.xlu0 %739
    %v741 = vsel %vm241, %v707, 0.0
    %742 = vadd.xlane.f32.xlu0 %v741
    %v743 = vpop.xlane.xlu0 %742
    %v744 = vsel %vm241, %v708, 0.0
    %745 = vadd.xlane.f32.xlu0 %v744
    %v746 = vpop.xlane.xlu0 %745
    %v747 = vsel %vm241, %v709, 0.0
    %748 = vadd.xlane.f32.xlu0 %v747
    %v749 = vpop.xlane.xlu0 %748
    %v750 = vsel %vm241, %v710, 0.0
    %751 = vadd.xlane.f32.xlu0 %v750
    %v752 = vpop.xlane.xlu0 %751
    %v753 = vsel %vm241, %v711, 0.0
    %754 = vadd.xlane.f32.xlu0 %v753
    %v755 = vpop.xlane.xlu0 %754
    %v756 = vsel %vm241, %v712, 0.0
    %757 = vadd.xlane.f32.xlu0 %v756
    %v758 = vpop.xlane.xlu0 %757
    %v759 = vsel %vm241, %v713, 0.0
    %760 = vadd.xlane.f32.xlu0 %v759
    %v761 = vpop.xlane.xlu0 %760
    %v762 = vmax.f32 %v716, 1e-24
    %v763 = vmax.f32 %v719, 1e-24
    %v764 = vmax.f32 %v722, 1e-24
    %v765 = vmax.f32 %v725, 1e-24
    %v766 = vmax.f32 %v728, 1e-24
    %v767 = vmax.f32 %v731, 1e-24
    %v768 = vmax.f32 %v734, 1e-24
    %v769 = vmax.f32 %v737, 1e-24
    %v770 = vmax.f32 %v740, 1e-24
    %v771 = vmax.f32 %v743, 1e-24
    %v772 = vmax.f32 %v746, 1e-24
    %v773 = vmax.f32 %v749, 1e-24
    %v774 = vmax.f32 %v752, 1e-24
    %v775 = vmax.f32 %v755, 1e-24
    %v776 = vmax.f32 %v758, 1e-24
    %v777 = vmax.f32 %v761, 1e-24
    %v778 = vrsqrt.pop %v762
    %v779 = vrsqrt.pop %v763
    %v780 = vrsqrt.pop %v764
    %v781 = vrsqrt.pop %v765
    %v782 = vrsqrt.pop %v766
    %v783 = vrsqrt.pop %v767
    %v784 = vrsqrt.pop %v768
    %v785 = vrsqrt.pop %v769
    %v786 = vrsqrt.pop %v770
    %v787 = vrsqrt.pop %v771
    %v788 = vrsqrt.pop %v772
    %v789 = vrsqrt.pop %v773
    %v790 = vrsqrt.pop %v774
    %v791 = vrsqrt.pop %v775
    %v792 = vrsqrt.pop %v776
    %v793 = vrsqrt.pop %v777
    %v794 = vmul.f32 %v620, %v778
    %v795 = vmul.f32 %v625, %v779
    %v796 = vmul.f32 %v630, %v780
    %v797 = vmul.f32 %v635, %v781
    %v798 = vmul.f32 %v640, %v782
    %v799 = vmul.f32 %v645, %v783
    %v800 = vmul.f32 %v650, %v784
    %v801 = vmul.f32 %v655, %v785
    %v802 = vmul.f32 %v660, %v786
    %v803 = vmul.f32 %v665, %v787
    %v804 = vmul.f32 %v670, %v788
    %v805 = vmul.f32 %v675, %v789
    %v806 = vmul.f32 %v680, %v790
    %v807 = vmul.f32 %v685, %v791
    %v808 = vmul.f32 %v690, %v792
    %v809 = vmul.f32 %v695, %v793
    %v811 = vsel %vm241, %v794, 0
    %v814 = vsel %vm241, %v795, 0
    %v817 = vsel %vm241, %v796, 0
    %v820 = vsel %vm241, %v797, 0
    %v823 = vsel %vm241, %v798, 0
    %v826 = vsel %vm241, %v799, 0
    %v829 = vsel %vm241, %v800, 0
    %v832 = vsel %vm241, %v801, 0
    %v835 = vsel %vm241, %v802, 0
    %v838 = vsel %vm241, %v803, 0
    %v841 = vsel %vm241, %v804, 0
    %v844 = vsel %vm241, %v805, 0
    %v847 = vsel %vm241, %v806, 0
    %v850 = vsel %vm241, %v807, 0
    %v853 = vsel %vm241, %v808, 0
    %v856 = vsel %vm241, %v809, 0
    %858 = vmatprep.subr.mxu0 0.0
    %859 = vmatpush1.msra.mxu0 %v46
    %860 = vmatprep.subr.mxu0 0.0
    %861 = vmatpush1.msra.mxu0 %v47
    %862 = vmatprep.subr.mxu0 0.0
    %863 = vmatpush1.msra.mxu0 %v48
    %864 = vmatprep.subr.mxu0 0.0
    %865 = vmatpush1.msra.mxu0 %v49
    %866 = vmatprep.subr.mxu0 0.0
    %867 = vmatpush1.msra.mxu0 %v50
    %868 = vmatprep.subr.mxu0 0.0
    %869 = vmatpush1.msra.mxu0 %v51
    %870 = vmatprep.subr.mxu0 0.0
    %871 = vmatpush1.msra.mxu0 %v52
    %872 = vmatprep.subr.mxu0 0.0
    %873 = vmatpush1.msra.mxu0 %v53
    %874 = vmatprep.subr.mxu0 0.0
    %875 = vmatpush1.msra.mxu0 0.0
    %876 = vmatprep.subr.mxu0 0.0
    %877 = vmatpush1.msra.mxu0 0.0
    %878 = vmatprep.subr.mxu0 0.0
    %879 = vmatpush1.msra.mxu0 0.0
    %880 = vmatprep.subr.mxu0 0.0
    %881 = vmatpush1.msra.mxu0 0.0
    %882 = vmatprep.subr.mxu0 0.0
    %883 = vmatpush1.msra.mxu0 0.0
    %884 = vmatprep.subr.mxu0 0.0
    %885 = vmatpush1.msra.mxu0 0.0
    %886 = vmatprep.subr.mxu0 0.0
    %887 = vmatpush1.msra.mxu0 0.0
    %888 = vmatprep.subr.mxu0 0.0
    %889 = vmatpush1.msra.mxu0 0.0
    %890 = vmatprep.subr.mxu0 0.0
    %891 = vmatpush1.msra.mxu0 0.0
    %892 = vmatprep.subr.mxu0 0.0
    %893 = vmatpush1.msra.mxu0 0.0
    %894 = vmatprep.subr.mxu0 0.0
    %895 = vmatpush1.msra.mxu0 0.0
    %896 = vmatprep.subr.mxu0 0.0
    %897 = vmatpush1.msra.mxu0 0.0
    %898 = vmatprep.subr.mxu0 0.0
    %899 = vmatpush1.msra.mxu0 0.0
    %900 = vmatprep.subr.mxu0 0.0
    %901 = vmatpush1.msra.mxu0 0.0
    %902 = vmatprep.subr.mxu0 0.0
    %903 = vmatpush1.msra.mxu0 0.0
    %904 = vmatprep.subr.mxu0 0.0
    %905 = vmatpush1.msra.mxu0 0.0
    %906 = vmatprep.subr.mxu0 0.0
    %907 = vmatpush1.msra.mxu0 0.0
    %908 = vmatprep.subr.mxu0 0.0
    %909 = vmatpush1.msra.mxu0 0.0
    %910 = vmatprep.subr.mxu0 0.0
    %911 = vmatpush1.msra.mxu0 0.0
    %912 = vmatprep.subr.mxu0 0.0
    %913 = vmatpush1.msra.mxu0 0.0
    %914 = vmatprep.subr.mxu0 0.0
    %915 = vmatpush1.msra.mxu0 0.0
    %916 = vmatprep.subr.mxu0 0.0
    %917 = vmatpush1.msra.mxu0 0.0
    %918 = vmatprep.subr.mxu0 0.0
    %919 = vmatpush1.msra.mxu0 0.0
    %920 = vmatprep.subr.mxu0 0.0
    %921 = vmatpush1.msra.mxu0 0.0
    %922 = vmatprep.mubr.f32.mxu0 0.0
    %923 = vmatmul.mubr.f32.gmra.mrb[0].mxu0 %v811
    %v924 = vpop.f32.mrb[0].mxu0
    %v925 = vadd.f32 %v342, %v924
    %v926 = vpop.f32.mrb[0].mxu0
    %927 = vmatprep.mubr.f32.mxu0 0.0
    %928 = vmatmul.mubr.f32.gmra.mrb[0].mxu0 %v814
    %v929 = vpop.f32.mrb[0].mxu0
    %v930 = vadd.f32 %v342, %v929
    %v931 = vpop.f32.mrb[0].mxu0
    %932 = vmatprep.mubr.f32.mxu0 0.0
    %933 = vmatmul.mubr.f32.gmra.mrb[0].mxu0 %v817
    %v934 = vpop.f32.mrb[0].mxu0
    %v935 = vadd.f32 %v342, %v934
    %v936 = vpop.f32.mrb[0].mxu0
    %937 = vmatprep.mubr.f32.mxu0 0.0
    %938 = vmatmul.mubr.f32.gmra.mrb[0].mxu0 %v820
    %v939 = vpop.f32.mrb[0].mxu0
    %v940 = vadd.f32 %v342, %v939
    %v941 = vpop.f32.mrb[0].mxu0
    %942 = vmatprep.mubr.f32.mxu0 0.0
    %943 = vmatmul.mubr.f32.gmra.mrb[0].mxu0 %v823
    %v944 = vpop.f32.mrb[0].mxu0
    %v945 = vadd.f32 %v342, %v944
    %v946 = vpop.f32.mrb[0].mxu0
    %947 = vmatprep.mubr.f32.mxu0 0.0
    %948 = vmatmul.mubr.f32.gmra.mrb[0].mxu0 %v826
    %v949 = vpop.f32.mrb[0].mxu0
    %v950 = vadd.f32 %v342, %v949
    %v951 = vpop.f32.mrb[0].mxu0
    %952 = vmatprep.mubr.f32.mxu0 0.0
    %953 = vmatmul.mubr.f32.gmra.mrb[0].mxu0 %v829
    %v954 = vpop.f32.mrb[0].mxu0
    %v955 = vadd.f32 %v342, %v954
    %v956 = vpop.f32.mrb[0].mxu0
    %957 = vmatprep.mubr.f32.mxu0 0.0
    %958 = vmatmul.mubr.f32.gmra.mrb[0].mxu0 %v832
    %v959 = vpop.f32.mrb[0].mxu0
    %v960 = vadd.f32 %v342, %v959
    %v961 = vpop.f32.mrb[0].mxu0
    %962 = vmatprep.mubr.f32.mxu0 0.0
    %963 = vmatmul.mubr.f32.gmra.mrb[0].mxu0 %v835
    %v964 = vpop.f32.mrb[0].mxu0
    %v965 = vadd.f32 %v342, %v964
    %v966 = vpop.f32.mrb[0].mxu0
    %967 = vmatprep.mubr.f32.mxu0 0.0
    %968 = vmatmul.mubr.f32.gmra.mrb[0].mxu0 %v838
    %v969 = vpop.f32.mrb[0].mxu0
    %v970 = vadd.f32 %v342, %v969
    %v971 = vpop.f32.mrb[0].mxu0
    %972 = vmatprep.mubr.f32.mxu0 0.0
    %973 = vmatmul.mubr.f32.gmra.mrb[0].mxu0 %v841
    %v974 = vpop.f32.mrb[0].mxu0
    %v975 = vadd.f32 %v342, %v974
    %v976 = vpop.f32.mrb[0].mxu0
    %977 = vmatprep.mubr.f32.mxu0 0.0
    %978 = vmatmul.mubr.f32.gmra.mrb[0].mxu0 %v844
    %v979 = vpop.f32.mrb[0].mxu0
    %v980 = vadd.f32 %v342, %v979
    %v981 = vpop.f32.mrb[0].mxu0
    %982 = vmatprep.mubr.f32.mxu0 0.0
    %983 = vmatmul.mubr.f32.gmra.mrb[0].mxu0 %v847
    %v984 = vpop.f32.mrb[0].mxu0
    %v985 = vadd.f32 %v342, %v984
    %v986 = vpop.f32.mrb[0].mxu0
    %987 = vmatprep.mubr.f32.mxu0 0.0
    %988 = vmatmul.mubr.f32.gmra.mrb[0].mxu0 %v850
    %v989 = vpop.f32.mrb[0].mxu0
    %v990 = vadd.f32 %v342, %v989
    %v991 = vpop.f32.mrb[0].mxu0
    %992 = vmatprep.mubr.f32.mxu0 0.0
    %993 = vmatmul.mubr.f32.gmra.mrb[0].mxu0 %v853
    %v994 = vpop.f32.mrb[0].mxu0
    %v995 = vadd.f32 %v342, %v994
    %v996 = vpop.f32.mrb[0].mxu0
    %997 = vmatprep.mubr.f32.mxu0 0.0
    %998 = vmatmul.mubr.f32.gmra.mrb[0].mxu0 %v856
    %v999 = vpop.f32.mrb[0].mxu0
    %v1000 = vadd.f32 %v342, %v999
    %v1001 = vpop.f32.mrb[0].mxu0
    %1002 = vdwg.mxu0
    %v1003 = vmul.f32 %v459, %v459
    %v1004 = vmul.f32 %v464, %v464
    %v1005 = vmul.f32 %v469, %v469
    %v1006 = vmul.f32 %v474, %v474
    %v1007 = vmul.f32 %v479, %v479
    %v1008 = vmul.f32 %v484, %v484
    %v1009 = vmul.f32 %v489, %v489
    %v1010 = vmul.f32 %v494, %v494
    %v1011 = vmul.f32 %v499, %v499
    %v1012 = vmul.f32 %v504, %v504
    %v1013 = vmul.f32 %v509, %v509
    %v1014 = vmul.f32 %v514, %v514
    %v1015 = vmul.f32 %v519, %v519
    %v1016 = vmul.f32 %v524, %v524
    %v1017 = vmul.f32 %v529, %v529
    %v1018 = vmul.f32 %v534, %v534
    %v1020 = vlaneseq
    %v1021 = vshrl.u32 %v1020, 7
    %v1022 = vsub.s32 0, %v1021
    %v1023 = vrot.slane %v57, %v1022
    %v1025 = vmul.f32 %v1003, %v1023
    %v1026 = vmul.f32 %v1004, %v1023
    %v1027 = vmul.f32 %v1005, %v1023
    %v1028 = vmul.f32 %v1006, %v1023
    %v1029 = vmul.f32 %v1007, %v1023
    %v1030 = vmul.f32 %v1008, %v1023
    %v1031 = vmul.f32 %v1009, %v1023
    %v1032 = vmul.f32 %v1010, %v1023
    %v1033 = vmul.f32 %v1011, %v1023
    %v1034 = vmul.f32 %v1012, %v1023
    %v1035 = vmul.f32 %v1013, %v1023
    %v1036 = vmul.f32 %v1014, %v1023
    %v1037 = vmul.f32 %v1015, %v1023
    %v1038 = vmul.f32 %v1016, %v1023
    %v1039 = vmul.f32 %v1017, %v1023
    %v1040 = vmul.f32 %v1018, %v1023
    %v1041 = vmul.f32 %v925, %v925
    %v1042 = vmul.f32 %v930, %v930
    %v1043 = vmul.f32 %v935, %v935
    %v1044 = vmul.f32 %v940, %v940
    %v1045 = vmul.f32 %v945, %v945
    %v1046 = vmul.f32 %v950, %v950
    %v1047 = vmul.f32 %v955, %v955
    %v1048 = vmul.f32 %v960, %v960
    %v1049 = vmul.f32 %v965, %v965
    %v1050 = vmul.f32 %v970, %v970
    %v1051 = vmul.f32 %v975, %v975
    %v1052 = vmul.f32 %v980, %v980
    %v1053 = vmul.f32 %v985, %v985
    %v1054 = vmul.f32 %v990, %v990
    %v1055 = vmul.f32 %v995, %v995
    %v1056 = vmul.f32 %v1000, %v1000
    %v1057 = vmul.f32 %v1041, %v1023
    %v1058 = vmul.f32 %v1042, %v1023
    %v1059 = vmul.f32 %v1043, %v1023
    %v1060 = vmul.f32 %v1044, %v1023
    %v1061 = vmul.f32 %v1045, %v1023
    %v1062 = vmul.f32 %v1046, %v1023
    %v1063 = vmul.f32 %v1047, %v1023
    %v1064 = vmul.f32 %v1048, %v1023
    %v1065 = vmul.f32 %v1049, %v1023
    %v1066 = vmul.f32 %v1050, %v1023
    %v1067 = vmul.f32 %v1051, %v1023
    %v1068 = vmul.f32 %v1052, %v1023
    %v1069 = vmul.f32 %v1053, %v1023
    %v1070 = vmul.f32 %v1054, %v1023
    %v1071 = vmul.f32 %v1055, %v1023
    %v1072 = vmul.f32 %v1056, %v1023
    %v1073 = vadd.f32 %v1025, %v1057
    %v1074 = vadd.f32 %v1026, %v1058
    %v1075 = vadd.f32 %v1027, %v1059
    %v1076 = vadd.f32 %v1028, %v1060
    %v1077 = vadd.f32 %v1029, %v1061
    %v1078 = vadd.f32 %v1030, %v1062
    %v1079 = vadd.f32 %v1031, %v1063
    %v1080 = vadd.f32 %v1032, %v1064
    %v1081 = vadd.f32 %v1033, %v1065
    %v1082 = vadd.f32 %v1034, %v1066
    %v1083 = vadd.f32 %v1035, %v1067
    %v1084 = vadd.f32 %v1036, %v1068
    %v1085 = vadd.f32 %v1037, %v1069
    %v1086 = vadd.f32 %v1038, %v1070
    %v1087 = vadd.f32 %v1039, %v1071
    %v1088 = vadd.f32 %v1040, %v1072
    %v1089 = vmul.f32 %v459, %v925
    %v1090 = vmul.f32 %v464, %v930
    %v1091 = vmul.f32 %v469, %v935
    %v1092 = vmul.f32 %v474, %v940
    %v1093 = vmul.f32 %v479, %v945
    %v1094 = vmul.f32 %v484, %v950
    %v1095 = vmul.f32 %v489, %v955
    %v1096 = vmul.f32 %v494, %v960
    %v1097 = vmul.f32 %v499, %v965
    %v1098 = vmul.f32 %v504, %v970
    %v1099 = vmul.f32 %v509, %v975
    %v1100 = vmul.f32 %v514, %v980
    %v1101 = vmul.f32 %v519, %v985
    %v1102 = vmul.f32 %v524, %v990
    %v1103 = vmul.f32 %v529, %v995
    %v1104 = vmul.f32 %v534, %v1000
    %v1105 = vmul.f32 %v1089, 2.0
    %v1106 = vmul.f32 %v1090, 2.0
    %v1107 = vmul.f32 %v1091, 2.0
    %v1108 = vmul.f32 %v1092, 2.0
    %v1109 = vmul.f32 %v1093, 2.0
    %v1110 = vmul.f32 %v1094, 2.0
    %v1111 = vmul.f32 %v1095, 2.0
    %v1112 = vmul.f32 %v1096, 2.0
    %v1113 = vmul.f32 %v1097, 2.0
    %v1114 = vmul.f32 %v1098, 2.0
    %v1115 = vmul.f32 %v1099, 2.0
    %v1116 = vmul.f32 %v1100, 2.0
    %v1117 = vmul.f32 %v1101, 2.0
    %v1118 = vmul.f32 %v1102, 2.0
    %v1119 = vmul.f32 %v1103, 2.0
    %v1120 = vmul.f32 %v1104, 2.0
    %v1122 = vlaneseq
    %v1123 = vshrl.u32 %v1122, 7
    %v1124 = vsub.s32 0, %v1123
    %v1125 = vrot.slane %v56, %v1124
    %v1127 = vmul.f32 %v1105, %v1125
    %v1128 = vmul.f32 %v1106, %v1125
    %v1129 = vmul.f32 %v1107, %v1125
    %v1130 = vmul.f32 %v1108, %v1125
    %v1131 = vmul.f32 %v1109, %v1125
    %v1132 = vmul.f32 %v1110, %v1125
    %v1133 = vmul.f32 %v1111, %v1125
    %v1134 = vmul.f32 %v1112, %v1125
    %v1135 = vmul.f32 %v1113, %v1125
    %v1136 = vmul.f32 %v1114, %v1125
    %v1137 = vmul.f32 %v1115, %v1125
    %v1138 = vmul.f32 %v1116, %v1125
    %v1139 = vmul.f32 %v1117, %v1125
    %v1140 = vmul.f32 %v1118, %v1125
    %v1141 = vmul.f32 %v1119, %v1125
    %v1142 = vmul.f32 %v1120, %v1125
    %v1143 = vadd.f32 %v1073, %v1127
    %v1144 = vadd.f32 %v1074, %v1128
    %v1145 = vadd.f32 %v1075, %v1129
    %v1146 = vadd.f32 %v1076, %v1130
    %v1147 = vadd.f32 %v1077, %v1131
    %v1148 = vadd.f32 %v1078, %v1132
    %v1149 = vadd.f32 %v1079, %v1133
    %v1150 = vadd.f32 %v1080, %v1134
    %v1151 = vadd.f32 %v1081, %v1135
    %v1152 = vadd.f32 %v1082, %v1136
    %v1153 = vadd.f32 %v1083, %v1137
    %v1154 = vadd.f32 %v1084, %v1138
    %v1155 = vadd.f32 %v1085, %v1139
    %v1156 = vadd.f32 %v1086, %v1140
    %v1157 = vadd.f32 %v1087, %v1141
    %v1158 = vadd.f32 %v1088, %v1142
    %vm1159 = vcmask 261120
    %v1160 = vsel %vm1159, %v1143, 0.0
    %1161 = vadd.xlane.f32.xlu0 %v1160
    %v1162 = vpop.xlane.xlu0 %1161
    %v1163 = vsel %vm1159, %v1144, 0.0
    %1164 = vadd.xlane.f32.xlu0 %v1163
    %v1165 = vpop.xlane.xlu0 %1164
    %v1166 = vsel %vm1159, %v1145, 0.0
    %1167 = vadd.xlane.f32.xlu0 %v1166
    %v1168 = vpop.xlane.xlu0 %1167
    %v1169 = vsel %vm1159, %v1146, 0.0
    %1170 = vadd.xlane.f32.xlu0 %v1169
    %v1171 = vpop.xlane.xlu0 %1170
    %v1172 = vsel %vm1159, %v1147, 0.0
    %1173 = vadd.xlane.f32.xlu0 %v1172
    %v1174 = vpop.xlane.xlu0 %1173
    %v1175 = vsel %vm1159, %v1148, 0.0
    %1176 = vadd.xlane.f32.xlu0 %v1175
    %v1177 = vpop.xlane.xlu0 %1176
    %v1178 = vsel %vm1159, %v1149, 0.0
    %1179 = vadd.xlane.f32.xlu0 %v1178
    %v1180 = vpop.xlane.xlu0 %1179
    %v1181 = vsel %vm1159, %v1150, 0.0
    %1182 = vadd.xlane.f32.xlu0 %v1181
    %v1183 = vpop.xlane.xlu0 %1182
    %v1184 = vsel %vm1159, %v1151, 0.0
    %1185 = vadd.xlane.f32.xlu0 %v1184
    %v1186 = vpop.xlane.xlu0 %1185
    %v1187 = vsel %vm1159, %v1152, 0.0
    %1188 = vadd.xlane.f32.xlu0 %v1187
    %v1189 = vpop.xlane.xlu0 %1188
    %v1190 = vsel %vm1159, %v1153, 0.0
    %1191 = vadd.xlane.f32.xlu0 %v1190
    %v1192 = vpop.xlane.xlu0 %1191
    %v1193 = vsel %vm1159, %v1154, 0.0
    %1194 = vadd.xlane.f32.xlu0 %v1193
    %v1195 = vpop.xlane.xlu0 %1194
    %v1196 = vsel %vm1159, %v1155, 0.0
    %1197 = vadd.xlane.f32.xlu0 %v1196
    %v1198 = vpop.xlane.xlu0 %1197
    %v1199 = vsel %vm1159, %v1156, 0.0
    %1200 = vadd.xlane.f32.xlu0 %v1199
    %v1201 = vpop.xlane.xlu0 %1200
    %v1202 = vsel %vm1159, %v1157, 0.0
    %1203 = vadd.xlane.f32.xlu0 %v1202
    %v1204 = vpop.xlane.xlu0 %1203
    %v1205 = vsel %vm1159, %v1158, 0.0
    %1206 = vadd.xlane.f32.xlu0 %v1205
    %v1207 = vpop.xlane.xlu0 %1206
    %v1224 = vlaneseq
    %v1225 = vand.u32 %v1224, 127
    %v1226 = vlaneseq
    %v1227 = vshrl.u32 %v1226, 7
    %v1228 = vsub.s32 %v1225, %v1227
    %v1229 = vrot.slane %v1162, %v1228
    %v1230 = vadd.s32 %v1225, 4294967288
    %v1231 = vlaneseq
    %v1232 = vshrl.u32 %v1231, 7
    %v1233 = vsub.s32 %v1230, %v1232
    %v1234 = vrot.slane %v1165, %v1233
    %vm1235 = vcmask 130112
    %v1236 = vsel %vm1235, %v1234, %v1229
    %v1237 = vadd.s32 %v1225, 4294967280
    %v1238 = vlaneseq
    %v1239 = vshrl.u32 %v1238, 7
    %v1240 = vsub.s32 %v1237, %v1239
    %v1241 = vrot.slane %v1168, %v1240
    %vm1242 = vcmask 195712
    %v1243 = vsel %vm1242, %v1241, %v1236
    %v1244 = vadd.s32 %v1225, 4294967272
    %v1245 = vlaneseq
    %v1246 = vshrl.u32 %v1245, 7
    %v1247 = vsub.s32 %v1244, %v1246
    %v1248 = vrot.slane %v1171, %v1247
    %vm1249 = vcmask 261312
    %v1250 = vsel %vm1249, %v1248, %v1243
    %v1251 = vadd.s32 %v1225, 4294967264
    %v1252 = vlaneseq
    %v1253 = vshrl.u32 %v1252, 7
    %v1254 = vsub.s32 %v1251, %v1253
    %v1255 = vrot.slane %v1174, %v1254
    %vm1256 = vcmask 326912
    %v1257 = vsel %vm1256, %v1255, %v1250
    %v1258 = vadd.s32 %v1225, 4294967256
    %v1259 = vlaneseq
    %v1260 = vshrl.u32 %v1259, 7
    %v1261 = vsub.s32 %v1258, %v1260
    %v1262 = vrot.slane %v1177, %v1261
    %vm1263 = vcmask 392512
    %v1264 = vsel %vm1263, %v1262, %v1257
    %v1265 = vadd.s32 %v1225, 4294967248
    %v1266 = vlaneseq
    %v1267 = vshrl.u32 %v1266, 7
    %v1268 = vsub.s32 %v1265, %v1267
    %v1269 = vrot.slane %v1180, %v1268
    %vm1270 = vcmask 458112
    %v1271 = vsel %vm1270, %v1269, %v1264
    %v1272 = vadd.s32 %v1225, 4294967240
    %v1273 = vlaneseq
    %v1274 = vshrl.u32 %v1273, 7
    %v1275 = vsub.s32 %v1272, %v1274
    %v1276 = vrot.slane %v1183, %v1275
    %vm1277 = vcmask 523712
    %v1278 = vsel %vm1277, %v1276, %v1271
    %v1279 = vadd.s32 %v1225, 4294967232
    %v1280 = vlaneseq
    %v1281 = vshrl.u32 %v1280, 7
    %v1282 = vsub.s32 %v1279, %v1281
    %v1283 = vrot.slane %v1186, %v1282
    %vm1284 = vcmask 589312
    %v1285 = vsel %vm1284, %v1283, %v1278
    %v1286 = vadd.s32 %v1225, 4294967224
    %v1287 = vlaneseq
    %v1288 = vshrl.u32 %v1287, 7
    %v1289 = vsub.s32 %v1286, %v1288
    %v1290 = vrot.slane %v1189, %v1289
    %vm1291 = vcmask 654912
    %v1292 = vsel %vm1291, %v1290, %v1285
    %v1293 = vadd.s32 %v1225, 4294967216
    %v1294 = vlaneseq
    %v1295 = vshrl.u32 %v1294, 7
    %v1296 = vsub.s32 %v1293, %v1295
    %v1297 = vrot.slane %v1192, %v1296
    %vm1298 = vcmask 720512
    %v1299 = vsel %vm1298, %v1297, %v1292
    %v1300 = vadd.s32 %v1225, 4294967208
    %v1301 = vlaneseq
    %v1302 = vshrl.u32 %v1301, 7
    %v1303 = vsub.s32 %v1300, %v1302
    %v1304 = vrot.slane %v1195, %v1303
    %vm1305 = vcmask 786112
    %v1306 = vsel %vm1305, %v1304, %v1299
    %v1307 = vadd.s32 %v1225, 4294967200
    %v1308 = vlaneseq
    %v1309 = vshrl.u32 %v1308, 7
    %v1310 = vsub.s32 %v1307, %v1309
    %v1311 = vrot.slane %v1198, %v1310
    %vm1312 = vcmask 851712
    %v1313 = vsel %vm1312, %v1311, %v1306
    %v1314 = vadd.s32 %v1225, 4294967192
    %v1315 = vlaneseq
    %v1316 = vshrl.u32 %v1315, 7
    %v1317 = vsub.s32 %v1314, %v1316
    %v1318 = vrot.slane %v1201, %v1317
    %vm1319 = vcmask 917312
    %v1320 = vsel %vm1319, %v1318, %v1313
    %v1321 = vadd.s32 %v1225, 4294967184
    %v1322 = vlaneseq
    %v1323 = vshrl.u32 %v1322, 7
    %v1324 = vsub.s32 %v1321, %v1323
    %v1325 = vrot.slane %v1204, %v1324
    %vm1326 = vcmask 982912
    %v1327 = vsel %vm1326, %v1325, %v1320
    %v1328 = vadd.s32 %v1225, 4294967176
    %v1329 = vlaneseq
    %v1330 = vshrl.u32 %v1329, 7
    %v1331 = vsub.s32 %v1328, %v1330
    %v1332 = vrot.slane %v1207, %v1331
    %vm1333 = vcmask 1048512
    %v1334 = vsel %vm1333, %v1332, %v1327
    %1336 = vst [vmem:[#allocation2] sm:$0x1] %v1334
    // Predicated region
    $region34: #{tpu_custom_call.1} parent=1 // pred_check
      _
    $region35: #{tpu_custom_call.1} parent=1 // pred_check_branch
      %1338 = sbr.rel (0) target = $region37
    $region36: #{tpu_custom_call.1} parent=1 // pred_region
      %s1340 = ssub.s32 16, 16
      %1341 = vsyncadd [#allocation3], %s1340
      %s1343 = sshll.u32 [#allocation2], 4
      %s1344 = int_to_ptr.vmem [resolvable:$true] %s1343
      %1346 = dma.vmem_to_hbm [thread:$0]  %s1344, 16, %s8, [#allocation3]
    $region37: #{tpu_custom_call.1} parent=1 // pred_fallthru
      _
    // Predicated region
    $region38: #{tpu_custom_call.1} parent=1 // pred_check
      _
    $region39: #{tpu_custom_call.1} parent=1 // pred_check_branch
      %1348 = sbr.rel (0) target = $region41
    $region40: #{tpu_custom_call.1} parent=1 // pred_region
      %1349 = dma.done [#allocation3], 16
    $region41: #{tpu_custom_call.1} parent=1 // pred_fallthru
      _
    %1350 = vsyncpa [#allocation3], 1

</llo_original>
